<compile_context>
chip_gen: v7x
topology: tpu7x:2x2x1
jax: 0.10.0
libtpu: 0.0.40
codegen_flags: <defaults>
</compile_context>

<pallas_src>
import functools

import jax
import jax.numpy as jnp
from jax.experimental import pallas as pl
from jax.experimental.pallas import tpu as pltpu


def _pick_row_tile(rows, lane_w, min_itemsize, max_itemsize, budget_bytes=2 << 20):
    """Largest divisor of `rows` that is a multiple of the dtype's sublane
    count (f32: 8, bf16: 16, int8/fp8: 32) -- or `rows` itself -- whose input
    block stays under `budget_bytes`.  If nothing fits the budget, return the
    smallest legal tile (never a silently over-budget one)."""
    sub = max(8, 32 // max(1, int(min_itemsize)))
    cands = [t for t in range(1, rows + 1)
             if rows % t == 0 and (t % sub == 0 or t == rows)]
    fitting = [t for t in cands if t * lane_w * max_itemsize <= budget_bytes]
    return max(fitting) if fitting else min(cands)


def _sf_distance_loss_kernel(pred_ref, gt_ref, out_ref, acc_ref, *,
                             alpha, beta, pos_weight, r_tile, lane_w, group8):
    # pred_ref / gt_ref: (1, 1, r_tile, lane_w) blocks
    # out_ref: (1, 1, 1, 1) f32 resident accumulator per (n, c)
    # acc_ref: (acc_rows, lane_w) f32 VMEM scratch (lane-dense partial sums)
    t = pl.program_id(2)
    n_t = pl.num_programs(2)

    p = jnp.tanh(pred_ref[...].astype(jnp.float32))
    g = gt_ref[...].astype(jnp.float32)

    a = jnp.abs(p - g)  # L1 base loss (reduction='none')

    # Cheap same-sign test: (p*g) > 0.  Diverges from sign(p)*sign(g) > 0 only
    # when the product underflows to zero -- negligible for a mean loss.
    same_sign = (p * g) > 0.0

    # loss_elem = a * w  =  where(same_sign, alpha * a**(beta+1), a)
    #                       [* where(g > 0, pos_weight, 1)]
    if beta == 1.0:
        boosted = a * a
    elif beta == 2.0:
        boosted = a * a * a
    else:
        boosted = jnp.power(a, beta) * a  # EUP path, only when actually needed
    if alpha != 1.0:
        boosted = boosted * alpha
    contrib = jnp.where(same_sign, boosted, a)
    if pos_weight != 1.0:
        contrib = contrib * jnp.where(g > 0.0, pos_weight, 1.0)

    @pl.when(t == 0)
    def _():
        acc_ref[...] = jnp.zeros_like(acc_ref)

    tile2d = contrib.reshape(r_tile, lane_w)
    if group8:
        # Fold sublane groups of 8 with pure VALU adds (layout-preserving
        # reshape, no XLU work in the steady state).
        tile2d = tile2d.reshape(r_tile // 8, 8, lane_w).sum(axis=0)
    acc_ref[...] += tile2d

    @pl.when(t == n_t - 1)
    def _():
        # Single cross-sublane/lane reduce + tiny store, once per (n, c).
        out_ref[...] = jnp.sum(acc_ref[...]).reshape(1, 1, 1, 1)


def distance_loss_sfl1(pred, gt, *, alpha=2.0, beta=1.0, pos_weight=1.0,
                       secondary_weight=1.0):
    """pred: (N, C, H, W), gt: (N, C+1, H, W) — NCHW, matching the PyTorch module."""
    N, C, H, W = pred.shape
    assert gt.shape == (N, C + 1, H, W), (pred.shape, gt.shape)
    L = H * W

    # Lane-dense plane layout: (rows, 128) whenever possible (free reshape of
    # contiguous NCHW); otherwise keep (H, W) with a full-width last dim.
    if L % 128 == 0:
        rows, lane_w = L // 128, 128
    else:
        rows, lane_w = H, W

    pred_r = pred.reshape(N, C, rows, lane_w)
    gt_r = gt.reshape(N, C + 1, rows, lane_w)

    it_min = min(pred.dtype.itemsize, gt.dtype.itemsize)
    it_max = max(pred.dtype.itemsize, gt.dtype.itemsize)
    r_tile = _pick_row_tile(rows, lane_w, it_min, it_max)
    n_tiles = rows // r_tile
    group8 = (r_tile % 8 == 0) and (r_tile > 8)
    acc_rows = 8 if group8 else r_tile

    kernel = functools.partial(
        _sf_distance_loss_kernel,
        alpha=float(alpha), beta=float(beta), pos_weight=float(pos_weight),
        r_tile=r_tile, lane_w=lane_w, group8=group8,
    )

    elems = N * C * L
    cost = pl.CostEstimate(
        flops=int(7 * elems),
        transcendentals=int(elems),  # tanh per element
        bytes_accessed=int(elems * pred.dtype.itemsize
                           + elems * gt.dtype.itemsize   # gt channel 0 never read
                           + N * C * 4),
    )

    # Per-(n, c) sums of the weighted L1 loss; mean + class weights done below.
    partial_sums = pl.pallas_call(
        kernel,
        out_shape=jax.ShapeDtypeStruct((N, C, 1, 1), jnp.float32),
        grid=(N, C, n_tiles),
        in_specs=[
            pl.BlockSpec((1, 1, r_tile, lane_w), lambda n, c, t: (n, c, t, 0)),
            # gt's dropped leading channel is handled here: block index c + 1
            pl.BlockSpec((1, 1, r_tile, lane_w), lambda n, c, t: (n, c + 1, t, 0)),
        ],
        out_specs=pl.BlockSpec((1, 1, 1, 1), lambda n, c, t: (n, c, 0, 0)),
        scratch_shapes=[pltpu.VMEM((acc_rows, lane_w), jnp.float32)],
        compiler_params=pltpu.CompilerParams(
            dimension_semantics=("parallel", "parallel", "arbitrary")),
        cost_estimate=cost,
    )(pred_r, gt_r)

    # Tiny epilogue in plain JAX: per-channel mean + class-weight combine.
    per_chan = partial_sums.reshape(N, C).sum(axis=0) / float(N * L)
    class_weights = jnp.concatenate(
        [jnp.ones((1,), jnp.float32),
         jnp.full((C - 1,), float(secondary_weight), jnp.float32)])
    return jnp.sum(per_chan * class_weights) / jnp.sum(class_weights)


def _reference_loss(pred, gt, *, alpha=2.0, beta=1.0, pos_weight=1.0,
                    secondary_weight=1.0):
    """Pure-JAX transcription of the PyTorch forward, for correctness check."""
    gt = gt[:, 1:, :, :]
    p = jnp.tanh(pred)
    a = jnp.abs(p - gt)
    same_sign = (jnp.sign(p) * jnp.sign(gt)) > 0
    w = jnp.where(same_sign, jnp.power(a, beta) * alpha, jnp.ones_like(gt))
    w = w * jnp.where(gt > 0, jnp.full_like(gt, pos_weight), jnp.ones_like(gt))
    loss = jnp.mean(a * w, axis=(0, 2, 3))
    C = loss.shape[0]
    cw = jnp.concatenate([jnp.ones((1,)), jnp.full((C - 1,), secondary_weight)])
    return jnp.sum(loss * cw) / jnp.sum(cw)


if __name__ == "__main__":
    key = jax.random.PRNGKey(0)
    k1, k2 = jax.random.split(key)

    N, C, H, W = 2, 4, 16, 16
    pred = jax.random.normal(k1, (N, C, H, W), dtype=jnp.float32)
    # gt has one extra leading channel that the module drops (gt[:, 1:])
    gt = jax.random.normal(k2, (N, C + 1, H, W), dtype=jnp.float32)

    # Default hyperparameters (alpha=2, beta=1, pos_weight=1, secondary_weight=1)
    out = jax.block_until_ready(distance_loss_sfl1(pred, gt))
    ref = _reference_loss(pred, gt)
    assert jnp.allclose(out, ref, atol=1e-5, rtol=1e-5), (out, ref)

    # Non-default hyperparameters (exercises pow / pos_weight / class-weight paths)
    kw = dict(alpha=1.5, beta=2.0, pos_weight=0.5, secondary_weight=0.3)
    out2 = jax.block_until_ready(distance_loss_sfl1(pred, gt, **kw))
    ref2 = _reference_loss(pred, gt, **kw)
    assert jnp.allclose(out2, ref2, atol=1e-5, rtol=1e-5), (out2, ref2)

    print("KERNEL_OK")
</pallas_src>

<mosaic_0001>
module attributes {stable_mosaic.version = 11 : i64} {
  func.func @_sf_distance_loss_kernel(%arg0: i32, %arg1: i32, %arg2: i32, %arg3: memref<1x1x2x128xf32, #tpu.memory_space<vmem>>, %arg4: memref<1x1x2x128xf32, #tpu.memory_space<vmem>>, %arg5: memref<1x1x1x1xf32, #tpu.memory_space<vmem>>, %arg6: memref<2x128xf32, #tpu.memory_space<vmem>>) attributes {dimension_semantics = [#tpu.dimension_semantics<parallel>, #tpu.dimension_semantics<parallel>, #tpu.dimension_semantics<arbitrary>], iteration_bounds = array<i64: 2, 4, 1>, scalar_prefetch = 0 : i64, scratch_operands = 1 : i64, tpu.core_type = #tpu.core_type<tc>, window_params = [{transform_indices = @transform_0, window_bounds = array<i64: 1, 1, 2, 128>}, {transform_indices = @transform_1, window_bounds = array<i64: 1, 1, 2, 128>}, {transform_indices = @transform_2, window_bounds = array<i64: 1, 1, 1, 1>}]} {
    %c0 = arith.constant 0 : index
    %c0_0 = arith.constant 0 : index
    %c0_1 = arith.constant 0 : index
    %c0_2 = arith.constant 0 : index
    %0 = vector.load %arg3[%c0, %c0_0, %c0_1, %c0_2] : memref<1x1x2x128xf32, #tpu.memory_space<vmem>>, vector<1x1x2x128xf32>
    %1 = math.tanh %0 : vector<1x1x2x128xf32>
    %c0_3 = arith.constant 0 : index
    %c0_4 = arith.constant 0 : index
    %c0_5 = arith.constant 0 : index
    %c0_6 = arith.constant 0 : index
    %2 = vector.load %arg4[%c0_3, %c0_4, %c0_5, %c0_6] : memref<1x1x2x128xf32, #tpu.memory_space<vmem>>, vector<1x1x2x128xf32>
    %3 = arith.subf %1, %2 : vector<1x1x2x128xf32>
    %4 = math.absf %3 : vector<1x1x2x128xf32>
    %5 = arith.mulf %1, %2 : vector<1x1x2x128xf32>
    %cst = arith.constant 0.000000e+00 : f32
    %6 = vector.broadcast %cst : f32 to vector<1x1x2x128xf32>
    %7 = arith.cmpf ogt, %5, %6 : vector<1x1x2x128xf32>
    %8 = arith.mulf %4, %4 : vector<1x1x2x128xf32>
    %cst_7 = arith.constant 2.000000e+00 : f32
    %9 = vector.broadcast %cst_7 : f32 to vector<1x1x2x128xf32>
    %10 = arith.mulf %8, %9 : vector<1x1x2x128xf32>
    %11 = arith.select %7, %10, %4 : vector<1x1x2x128xi1>, vector<1x1x2x128xf32>
    %c0_i32 = arith.constant 0 : i32
    %12 = arith.cmpi eq, %arg2, %c0_i32 : i32
    %13 = arith.extui %12 : i1 to i32
    %c0_i32_8 = arith.constant 0 : i32
    %14 = arith.cmpi ne, %13, %c0_i32_8 : i32
    scf.if %14 {
      %cst_15 = arith.constant 0.000000e+00 : f32
      %22 = vector.broadcast %cst_15 : f32 to vector<2x128xf32>
      %c0_16 = arith.constant 0 : index
      %c0_17 = arith.constant 0 : index
      %23 = vector.load %arg6[%c0_16, %c0_17] : memref<2x128xf32, #tpu.memory_space<vmem>>, vector<2x128xf32>
      tpu.vector_store %arg6[%c0_16, %c0_17], %22 {strides = array<i32>} : memref<2x128xf32, #tpu.memory_space<vmem>>, vector<2x128xf32>,
    } else {
    }
    %15 = vector.shape_cast %11 : vector<1x1x2x128xf32> to vector<2x128xf32>
    %c0_9 = arith.constant 0 : index
    %c0_10 = arith.constant 0 : index
    %16 = vector.load %arg6[%c0_9, %c0_10] : memref<2x128xf32, #tpu.memory_space<vmem>>, vector<2x128xf32>
    %17 = arith.addf %16, %15 : vector<2x128xf32>
    %c0_11 = arith.constant 0 : index
    %c0_12 = arith.constant 0 : index
    %18 = vector.load %arg6[%c0_11, %c0_12] : memref<2x128xf32, #tpu.memory_space<vmem>>, vector<2x128xf32>
    tpu.vector_store %arg6[%c0_11, %c0_12], %17 {strides = array<i32>} : memref<2x128xf32, #tpu.memory_space<vmem>>, vector<2x128xf32>,
    %c0_i32_13 = arith.constant 0 : i32
    %19 = arith.cmpi eq, %arg2, %c0_i32_13 : i32
    %20 = arith.extui %19 : i1 to i32
    %c0_i32_14 = arith.constant 0 : i32
    %21 = arith.cmpi ne, %20, %c0_i32_14 : i32
    scf.if %21 {
      %c0_15 = arith.constant 0 : index
      %c0_16 = arith.constant 0 : index
      %22 = vector.load %arg6[%c0_15, %c0_16] : memref<2x128xf32, #tpu.memory_space<vmem>>, vector<2x128xf32>
      %23 = vector.shape_cast %22 : vector<2x128xf32> to vector<1x2x128xf32>
      %cst_17 = arith.constant dense<0.000000e+00> : vector<1xf32>
      %24 = vector.multi_reduction <add>, %23, %cst_17 [1, 2] : vector<1x2x128xf32> to vector<1xf32>
      %25 = vector.shape_cast %24 : vector<1xf32> to vector<1x1x1xf32>
      %26 = vector.extract %25[0, 0, 0] : f32 from vector<1x1x1xf32>
      %27 = vector.broadcast %26 : f32 to vector<1x1x1x1xf32>
      %c0_18 = arith.constant 0 : index
      %c0_19 = arith.constant 0 : index
      %c0_20 = arith.constant 0 : index
      %c0_21 = arith.constant 0 : index
      %28 = vector.load %arg5[%c0_18, %c0_19, %c0_20, %c0_21] : memref<1x1x1x1xf32, #tpu.memory_space<vmem>>, vector<1x1x1x1xf32>
      tpu.vector_store %arg5[%c0_18, %c0_19, %c0_20, %c0_21], %27 {strides = array<i32>} : memref<1x1x1x1xf32, #tpu.memory_space<vmem>>, vector<1x1x1x1xf32>,
    } else {
    }
    return
  }
  func.func @transform_0(%arg0: i32, %arg1: i32, %arg2: i32) -> (i32, i32, i32, i32) {
    %c0_i32 = arith.constant 0 : i32
    %c0_i32_0 = arith.constant 0 : i32
    return %arg0, %arg1, %arg2, %c0_i32 : i32, i32, i32, i32
  }
  func.func @transform_1(%arg0: i32, %arg1: i32, %arg2: i32) -> (i32, i32, i32, i32) {
    %c1_i32 = arith.constant 1 : i32
    %0 = arith.addi %arg1, %c1_i32 : i32
    %c0_i32 = arith.constant 0 : i32
    %c0_i32_0 = arith.constant 0 : i32
    return %arg0, %0, %arg2, %c0_i32 : i32, i32, i32, i32
  }
  func.func @transform_2(%arg0: i32, %arg1: i32, %arg2: i32) -> (i32, i32, i32, i32) {
    %c0_i32 = arith.constant 0 : i32
    %c0_i32_0 = arith.constant 0 : i32
    %c0_i32_1 = arith.constant 0 : i32
    return %arg0, %arg1, %c0_i32, %c0_i32_0 : i32, i32, i32, i32
  }
}

</mosaic_0001>

<llo_original>
// kernel: tpu_custom_call.1
$region0: #{tpu_custom_call.1}
  #allocation0 [shape = 'u32[]', space=smem, size = 0x4, offset = 0x4, fixed_abs, tag = 'smem constant byte address 0x4 - core index']
  #allocation1 [shape = 'u32[144,128]{1,0:T(1,128)}', space=vmem, size = 0x12000, scoped, tag = 'internal scratch']
  #allocation2 [shape = 'f32[2,128]{1,0:T(2,128)}', space=vmem, size = 0x400, scoped, tag = 'scratch operand']
  %s0 = inlined_call_operand.hbm [shape: f32[2,4,2,128], index: 0, kind: input, shape index: {}]
  %s1 = inlined_call_operand.hbm [shape: f32[2,5,2,128], index: 1, kind: input, shape index: {}]
  %s2 = inlined_call_operand.vmem [shape: f32[2,4,1,1], index: 2, kind: output, shape index: {}]
  %s3 = sld [smem:[#allocation0]]
  $region57: #{tpu_custom_call.1} parent=0
    _
  %s5 = ssub.s32 1, %s3
  %s6 = scalar_select 0, %s5, %s3
  $region1: #{tpu_custom_call.1} parent=0
    #allocation3 [shape = 'u8[2048]{0}', space=vmem, size = 0x800, scoped, tag = 'input window, operand 0']
    #allocation4 [shape = 's32[2]{0}', space=sflag, size = 0x8, scoped, tag = 'scoped memory for tpu_custom_call.1']
    #allocation5 [shape = 'u8[2048]{0}', space=vmem, size = 0x800, scoped, tag = 'input window, operand 1']
    #allocation6 [shape = 's32[2]{0}', space=sflag, size = 0x8, scoped, tag = 'scoped memory for tpu_custom_call.1']
    %7 = vsyncpa [#allocation4], 0
    %s8 = scalar_lea.sflag [#allocation4], 1
    %9 = vsyncpa %s8, 0
    %10 = vsyncpa [#allocation6], 0
    %s11 = scalar_lea.sflag [#allocation6], 1
    %12 = vsyncpa %s11, 0
    loop: start=0, step=1, limit=10
    $region2: #{tpu_custom_call.1} parent=1 // loop_pre_header
      _
    $region3: #{tpu_custom_call.1} parent=1 // loop_header
      %s14 = sphi 0, %s18
      %p15 = scmp.ge.s32.totalorder %s14, 10
      %s21 = sphi 0, %s40
      %s22 = sphi 0, %s36
      %s23 = sphi 0, %s32
      %s24 = sphi 0, %s21
      %s25 = sphi 0, %s22
      %s26 = sphi 0, %s23
      %s27 = sphi 0, %s24
      %s28 = sphi 0, %s25
      %s29 = sphi 0, %s26
      %s47 = sphi 0, %s49
      %s50 = sphi 0, %s47
      %s51 = sphi 0, %s50
      %s67 = sphi 0, %s51
      %s79 = sphi 0, %s81
      %s82 = sphi 0, %s79
      %s83 = sphi 0, %s82
      %s99 = sphi 0, %s83
      %s107 = sphi 0, %s109
      %s110 = sphi 0, %s107
      %s111 = sphi 0, %s110
      %s127 = sphi 0, %s111
    $region4: #{tpu_custom_call.1} parent=1 // loop_header_branch
      %17 = sbr.rel (%p15) target = $region8
    $region5: #{tpu_custom_call.1} parent=1 // loop_body
      %s19 = ssub.s32 %s14, 1
      %s20 = ssub.s32 %s14, 2
      %s30 = sadd.s32 1, %s23
      %p31 = scmp.ge.s32.totalorder %s30, 1
      %s32 = scalar_select %p31, 0, %s30
      %s33 = sadd.s32 1, %s22
      %s34 = scalar_select %p31, %s33, %s22
      %p35 = scmp.ge.s32.totalorder %s34, 4
      %s36 = scalar_select %p35, 0, %s34
      %s37 = sadd.s32 1, %s21
      %s38 = scalar_select %p35, %s37, %s21
      %p39 = scmp.ge.s32.totalorder %s38, 2
      %s40 = scalar_select %p39, 0, %s38
      %s41 = ssub.s32 %s21, %s40
      %s42 = ssub.s32 %s22, %s36
      %s43 = sor.u32 %s41, %s42
      %s44 = ssub.s32 %s23, %s32
      %s45 = sor.u32 %s43, %s44
      %p46 = scmp.eq.s32.totalorder %s45, 0
      %s48 = sadd.s32 %s47, 1
      %s49 = scalar_select %p46, %s47, %s48
      %p52 = pneg %p46
      %p53 = scmp.eq.s32.totalorder %s14, 7
      %p54 = por %p52, %p53
      %p55 = scmp.ne.s32.totalorder %s47, %s50
      %p56 = scmp.eq.s32.totalorder %s14, 0
      %p57 = por %p55, %p56
      %p58 = scmp.ne.s32.totalorder %s47, %s50
      %p59 = scmp.eq.s32.totalorder %s19, 7
      %p60 = por %p58, %p59
      %p61 = scmp.ne.s32.totalorder %s50, %s51
      %p62 = scmp.eq.s32.totalorder %s19, 0
      %p63 = por %p61, %p62
      %p64 = scmp.ne.s32.totalorder %s50, %s51
      %p65 = scmp.eq.s32.totalorder %s20, 7
      %p66 = por %p64, %p65
      %p68 = scmp.ne.s32.totalorder %s51, %s67
      %p69 = scmp.eq.s32.totalorder %s20, 0
      %p70 = por %p68, %p69
      %s71 = sadd.s32 %s22, 1
      %s72 = sadd.s32 %s36, 1
      %s73 = ssub.s32 %s21, %s40
      %s74 = ssub.s32 %s71, %s72
      %s75 = sor.u32 %s73, %s74
      %s76 = ssub.s32 %s23, %s32
      %s77 = sor.u32 %s75, %s76
      %p78 = scmp.eq.s32.totalorder %s77, 0
      %s80 = sadd.s32 %s79, 1
      %s81 = scalar_select %p78, %s79, %s80
      %p84 = pneg %p78
      %p85 = scmp.eq.s32.totalorder %s14, 7
      %p86 = por %p84, %p85
      %p87 = scmp.ne.s32.totalorder %s79, %s82
      %p88 = scmp.eq.s32.totalorder %s14, 0
      %p89 = por %p87, %p88
      %p90 = scmp.ne.s32.totalorder %s79, %s82
      %p91 = scmp.eq.s32.totalorder %s19, 7
      %p92 = por %p90, %p91
      %p93 = scmp.ne.s32.totalorder %s82, %s83
      %p94 = scmp.eq.s32.totalorder %s19, 0
      %p95 = por %p93, %p94
      %p96 = scmp.ne.s32.totalorder %s82, %s83
      %p97 = scmp.eq.s32.totalorder %s20, 7
      %p98 = por %p96, %p97
      %p100 = scmp.ne.s32.totalorder %s83, %s99
      %p101 = scmp.eq.s32.totalorder %s20, 0
      %p102 = por %p100, %p101
      %s103 = ssub.s32 %s21, %s40
      %s104 = ssub.s32 %s22, %s36
      %s105 = sor.u32 %s103, %s104
      %p106 = scmp.eq.s32.totalorder %s105, 0
      %s108 = sadd.s32 %s107, 1
      %s109 = scalar_select %p106, %s107, %s108
      %p112 = pneg %p106
      %p113 = scmp.eq.s32.totalorder %s14, 7
      %p114 = por %p112, %p113
      %p115 = scmp.ne.s32.totalorder %s107, %s110
      %p116 = scmp.eq.s32.totalorder %s14, 0
      %p117 = por %p115, %p116
      %p118 = scmp.ne.s32.totalorder %s107, %s110
      %p119 = scmp.eq.s32.totalorder %s19, 7
      %p120 = por %p118, %p119
      %p121 = scmp.ne.s32.totalorder %s110, %s111
      %p122 = scmp.eq.s32.totalorder %s19, 0
      %p123 = por %p121, %p122
      %p124 = scmp.ne.s32.totalorder %s110, %s111
      %p125 = scmp.eq.s32.totalorder %s20, 7
      %p126 = por %p124, %p125
      %p128 = scmp.ne.s32.totalorder %s111, %s127
      %p129 = scmp.eq.s32.totalorder %s20, 0
      %p130 = por %p128, %p129
      %p131 = scmp.le.s32.totalorder 1, %s14
      %p132 = scmp.lt.s32.totalorder %s14, 9
      %p133 = pnand %p131, %p132
      %p134 = pneg %p133
      // Predicated region
      $region9: #{tpu_custom_call.1} parent=5 // pred_check
        _
      $region10: #{tpu_custom_call.1} parent=5 // pred_check_branch
        %136 = sbr.rel (%p133) target = $region12
      $region11: #{tpu_custom_call.1} parent=5 // pred_region
        %s137 = ssub.s32 %s14, 1
      $region12: #{tpu_custom_call.1} parent=5 // pred_fallthru
        _
      %p138 = scmp.lt.s32.totalorder %s14, 8
      // Predicated region
      $region13: #{tpu_custom_call.1} parent=5 // pred_check
        %p139 = pneg %p138
      $region14: #{tpu_custom_call.1} parent=5 // pred_check_branch
        %141 = sbr.rel (%p139) target = $region16
      $region15: #{tpu_custom_call.1} parent=5 // pred_region
        // Predicated region
        $region17: #{tpu_custom_call.1} parent=15 // pred_check
          %p142 = pneg %p57
        $region18: #{tpu_custom_call.1} parent=15 // pred_check_branch
          %144 = sbr.rel (%p142) target = $region20
        $region19: #{tpu_custom_call.1} parent=15 // pred_region
          %s145 = sand.u32 %s47, 1
          %s146 = scalar_lea.sflag [#allocation4], %s145
          %s147 = sand.u32 %s47, 1
          %s148 = smul.addr %s147, 2
          %s149 = scalar_lea.vmem [#allocation3], %s148
          %s151 = ssub.s32 32, 32
          %152 = vsyncadd %s146, %s151
          %s153 = sadd.s32 %s23, %s22
          %s154 = smul.addr %s21, 4
          %s155 = sadd.s32 %s153, %s154
          %s156 = smul.addr %s155, 32
          %s157 = scalar_lea.hbm %s0, %s156
          %s159 = sshll.u32 %s149, 4
          %s160 = int_to_ptr.vmem [resolvable:$true] %s159
          %162 = dma.hbm_to_vmem [thread:$0]  %s157, 32, %s160, %s146
        $region20: #{tpu_custom_call.1} parent=15 // pred_fallthru
          _
        // Predicated region
        $region21: #{tpu_custom_call.1} parent=15 // pred_check
          %p163 = pneg %p89
        $region22: #{tpu_custom_call.1} parent=15 // pred_check_branch
          %165 = sbr.rel (%p163) target = $region24
        $region23: #{tpu_custom_call.1} parent=15 // pred_region
          %s166 = sand.u32 %s79, 1
          %s167 = scalar_lea.sflag [#allocation6], %s166
          %s168 = sand.u32 %s79, 1
          %s169 = smul.addr %s168, 2
          %s170 = scalar_lea.vmem [#allocation5], %s169
          %s171 = sadd.s32 %s22, 1
          %s173 = ssub.s32 32, 32
          %174 = vsyncadd %s167, %s173
          %s175 = sadd.s32 %s23, %s171
          %s176 = smul.addr %s21, 5
          %s177 = sadd.s32 %s175, %s176
          %s178 = smul.addr %s177, 32
          %s179 = scalar_lea.hbm %s1, %s178
          %s181 = sshll.u32 %s170, 4
          %s182 = int_to_ptr.vmem [resolvable:$true] %s181
          %184 = dma.hbm_to_vmem [thread:$0]  %s179, 32, %s182, %s167
        $region24: #{tpu_custom_call.1} parent=15 // pred_fallthru
          _
      $region16: #{tpu_custom_call.1} parent=5 // pred_fallthru
        _
      %p185 = scmp.le.s32.totalorder 1, %s14
      %p186 = scmp.lt.s32.totalorder %s14, 9
      %p187 = pnand %p185, %p186
      %p188 = pneg %p187
      // Predicated region
      $region25: #{tpu_custom_call.1} parent=5 // pred_check
        _
      $region26: #{tpu_custom_call.1} parent=5 // pred_check_branch
        %190 = sbr.rel (%p187) target = $region28
      $region27: #{tpu_custom_call.1} parent=5 // pred_region
        %s191 = ssub.s32 %s14, 1
        %s192 = sand.u32 %s50, 1
        %s193 = scalar_lea.sflag [#allocation4], %s192
        %s194 = sand.u32 %s50, 1
        %s195 = smul.addr %s194, 2
        %s196 = scalar_lea.vmem [#allocation3], %s195
        // Predicated region
        $region29: #{tpu_custom_call.1} parent=27 // pred_check
          %p197 = pneg %p63
        $region30: #{tpu_custom_call.1} parent=27 // pred_check_branch
          %199 = sbr.rel (%p197) target = $region32
        $region31: #{tpu_custom_call.1} parent=27 // pred_region
          %200 = dma.done %s193, 32
        $region32: #{tpu_custom_call.1} parent=27 // pred_fallthru
          _
        %s201 = sand.u32 %s82, 1
        %s202 = scalar_lea.sflag [#allocation6], %s201
        %s203 = sand.u32 %s82, 1
        %s204 = smul.addr %s203, 2
        %s205 = scalar_lea.vmem [#allocation5], %s204
        // Predicated region
        $region33: #{tpu_custom_call.1} parent=27 // pred_check
          %p206 = pneg %p95
        $region34: #{tpu_custom_call.1} parent=27 // pred_check_branch
          %208 = sbr.rel (%p206) target = $region36
        $region35: #{tpu_custom_call.1} parent=27 // pred_region
          %209 = dma.done %s202, 32
        $region36: #{tpu_custom_call.1} parent=27 // pred_fallthru
          _
        %s210 = sand.u32 %s50, 1
        %s211 = scalar_lea.sflag [#allocation4], %s210
        %s212 = sand.u32 %s50, 1
        %s213 = smul.addr %s212, 2
        %s214 = scalar_lea.vmem [#allocation3], %s213
        %p215 = pneg %p63
        %p216 = pneg %p60
        %s217 = sand.u32 %s82, 1
        %s218 = scalar_lea.sflag [#allocation6], %s217
        %s219 = sand.u32 %s82, 1
        %s220 = smul.addr %s219, 2
        %s221 = scalar_lea.vmem [#allocation5], %s220
        %p222 = pneg %p95
        %p223 = pneg %p92
        %p224 = pneg %p123
        %p225 = pneg %p120
        %p226 = scmp.lt.s32.totalorder %s24, 1
        %s227 = scalar_select %p226, %s24, 1
        %p228 = scmp.lt.s32.totalorder %s25, 3
        %s229 = scalar_select %p228, %s25, 3
        %s230 = smul.addr %s227, 4
        %s231 = sadd.s32 %s229, %s230
        %s232 = scalar_lea.vmem %s2, %s231
        %s233 = sadd.s32 %s25, 1
        %p234 = scmp.lt.s32.totalorder %s24, 1
        %s235 = scalar_select %p234, %s24, 1
        %p236 = scmp.lt.s32.totalorder %s25, 3
        %s237 = scalar_select %p236, %s25, 3
        %s238 = smul.addr %s235, 4
        %s239 = sadd.s32 %s237, %s238
        %s240 = scalar_lea.vmem %s2, %s239
        %v241 = vld [vmem:[%s196] sm:$0x3]
        %v242 = vtanh.pop %v241
        %v243 = vld [vmem:[%s205] sm:$0x3]
        %v244 = vsub.f32 %v242, %v243
        %v245 = vand.u32 2147483647, %v244
        %v246 = vmul.f32 %v242, %v243
        %vm247 = vcmp.gt.f32.partialorder %v246, 0.0
        %v248 = vmul.f32 %v245, %v245
        %v249 = vmul.f32 %v248, 2.0
        %v250 = vsel %vm247, %v249, %v245
        %p251 = scmp.eq.s32.totalorder %s26, 0
        // Predicated region
        $region37: #{tpu_custom_call.1} parent=27 // pred_check
          %p252 = pneg %p251
        $region38: #{tpu_custom_call.1} parent=27 // pred_check_branch
          %254 = sbr.rel (%p252) target = $region40
        $region39: #{tpu_custom_call.1} parent=27 // pred_region
          %255 = vst [vmem:[#allocation2] sm:$0x3] 0.0
        $region40: #{tpu_custom_call.1} parent=27 // pred_fallthru
          _
        %v256 = vld [vmem:[#allocation2] sm:$0x3]
        %v257 = vadd.f32 %v256, %v250
        %258 = vst [vmem:[#allocation2] sm:$0x3] %v257
        // Predicated region
        $region41: #{tpu_custom_call.1} parent=27 // pred_check
          %p259 = pneg %p251
        $region42: #{tpu_custom_call.1} parent=27 // pred_check_branch
          %261 = sbr.rel (%p259) target = $region44
        $region43: #{tpu_custom_call.1} parent=27 // pred_region
          %v262 = vld [vmem:[#allocation2] sm:$0x3]
          %vm263 = vcmask 1041408
          %v264 = vsel %vm263, %v262, 0.0
          %265 = vadd.xlane.f32.xlu0 %v264
          %v266 = vpop.xlane.xlu0 %265
          %v267 = vrot.slane %v266, 4
          %v268 = vadd.f32 %v266, %v267
          %v269 = vrot.slane %v268, 2
          %v270 = vadd.f32 %v268, %v269
          %v271 = vrot.slane %v270, 1
          %v272 = vadd.f32 %v270, %v271
          %s273 = vtos %v272
          %v274 = vstv %s273
          %vm275 = vcmask 0
          %276 = vst.msk [vmem:[%s240] sm:$0x1] %vm275, %v274
        $region44: #{tpu_custom_call.1} parent=27 // pred_fallthru
          _
        %p277 = scmp.lt.s32.totalorder %s24, 1
        %s278 = scalar_select %p277, %s24, 1
        %p279 = scmp.lt.s32.totalorder %s25, 3
        %s280 = scalar_select %p279, %s25, 3
        %s281 = smul.addr %s278, 4
        %s282 = sadd.s32 %s280, %s281
        %s283 = scalar_lea.vmem %s2, %s282
        // Predicated region
        $region45: #{tpu_custom_call.1} parent=27 // pred_check
          %p284 = pneg %p120
        $region46: #{tpu_custom_call.1} parent=27 // pred_check_branch
          %286 = sbr.rel (%p284) target = $region48
        $region47: #{tpu_custom_call.1} parent=27 // pred_region
          _
        $region48: #{tpu_custom_call.1} parent=27 // pred_fallthru
          _
      $region28: #{tpu_custom_call.1} parent=5 // pred_fallthru
        _
      %p287 = scmp.le.s32.totalorder 2, %s14
      // Predicated region
      $region49: #{tpu_custom_call.1} parent=5 // pred_check
        %p288 = pneg %p287
      $region50: #{tpu_custom_call.1} parent=5 // pred_check_branch
        %290 = sbr.rel (%p288) target = $region52
      $region51: #{tpu_custom_call.1} parent=5 // pred_region
        %s291 = ssub.s32 %s14, 2
        // Predicated region
        $region53: #{tpu_custom_call.1} parent=51 // pred_check
          %p292 = pneg %p126
        $region54: #{tpu_custom_call.1} parent=51 // pred_check_branch
          %294 = sbr.rel (%p292) target = $region56
        $region55: #{tpu_custom_call.1} parent=51 // pred_region
          %p295 = scmp.lt.s32.totalorder %s27, 1
          %s296 = scalar_select %p295, %s27, 1
          %p297 = scmp.lt.s32.totalorder %s28, 3
          %s298 = scalar_select %p297, %s28, 3
          %s299 = smul.addr %s296, 4
          %s300 = sadd.s32 %s298, %s299
          %s301 = scalar_lea.vmem %s2, %s300
        $region56: #{tpu_custom_call.1} parent=51 // pred_fallthru
          _
      $region52: #{tpu_custom_call.1} parent=5 // pred_fallthru
        _
    $region6: #{tpu_custom_call.1} parent=1 // loop_footer
      %s18 = sadd.s32 1, %s14
    $region7: #{tpu_custom_call.1} parent=1 // loop_footer_branch
      %13 = sbr.rel target = $region3
    $region8: #{tpu_custom_call.1} parent=1 // loop_exit
      _
    %302 = vsyncpa [#allocation4], 1
    %s303 = scalar_lea.sflag [#allocation4], 1
    %304 = vsyncpa %s303, 1
    %305 = vsyncpa [#allocation6], 1
    %s306 = scalar_lea.sflag [#allocation6], 1
    %307 = vsyncpa %s306, 1

</llo_original>
